<compile_context>
chip_gen: v7x
topology: tpu7x:2x2x1
jax: 0.10.0
libtpu: 0.0.40
codegen_flags: <defaults>
</compile_context>

<pallas_src>
import jax
import jax.numpy as jnp
from jax.experimental import pallas as pl
from jax.experimental.pallas import tpu as pltpu


def _masked_leafq_kernel(scale_ref, bias_ref, value_ref, mask_ref, origin_ref, out_ref):
    # decode(v) = (v - zero_point) * scale  ==  v * scale + bias,  bias = -zp * scale
    scale = scale_ref[0]
    bias = bias_ref[0]
    decoded = value_ref[...].astype(jnp.float32) * scale + bias
    m = mask_ref[...]
    if m.dtype != jnp.bool_:          # accept bool or any integer mask dtype
        m = m != 0
    out_ref[...] = jnp.where(m, decoded, origin_ref[...]).astype(out_ref.dtype)


def _round_up(x, m):
    return (x + m - 1) // m * m


def _flatten_pad(x, padded_total, rows, width):
    flat = x.reshape(-1)
    pad = padded_total - flat.shape[0]
    if pad:
        flat = jnp.pad(flat, (0, pad))
    return flat.reshape(rows, width)


def masked_leafq_forward(value, mask, origin, scale, zero_point,
                         *, lane_width=1024, max_tile_rows=1024):
    """out = where(mask, (value - zero_point) * scale, origin).

    value: int8, mask: bool (or int), origin: float — all the same shape.
    Handles arbitrary shapes by padding the flattened buffers to a full tile.
    """
    assert value.shape == mask.shape == origin.shape
    orig_shape = origin.shape
    total = origin.size

    # Lane-dense layout: last dim a large multiple of 128.
    W = _round_up(min(lane_width, max(total, 128)), 128)
    rows = pl.cdiv(total, W)
    # Row tile: multiple of 32 (int8/bool sublane packing), capped at
    # max_tile_rows (~1M elems/step with W=1024, safe for v7x's 64 MiB VMEM),
    # and sized so large inputs still get >= ~4 grid steps (v7x megacore).
    tile_rows = max(32, min(max_tile_rows, _round_up(pl.cdiv(rows, 4), 32)))
    M = _round_up(rows, tile_rows)
    padded_total = M * W

    v2 = _flatten_pad(value, padded_total, M, W)
    m2 = _flatten_pad(mask, padded_total, M, W)      # bool goes straight in, no astype pass
    o2 = _flatten_pad(origin, padded_total, M, W)

    tile_elems = tile_rows * W
    # Double-buffered footprint: (1 + 1 + 4) B in + 4 B out per tile element,
    # plus slack for internal scratch. Capped well under physical VMEM.
    vmem_bytes = min(2 * tile_elems * (1 + 1 + 4 + 4) + (4 << 20), 64 << 20)

    def tile_spec():
        return pl.BlockSpec((tile_rows, W), lambda i: (i, 0))

    # NOTE: if the caller can donate `origin`, input_output_aliases={4: 0}
    # would reuse its buffer for the output; not enabled here since the demo
    # reads `origin` again afterwards.
    out = pl.pallas_call(
        _masked_leafq_kernel,
        out_shape=jax.ShapeDtypeStruct((M, W), origin.dtype),
        grid=(M // tile_rows,),
        in_specs=[
            pl.BlockSpec(memory_space=pltpu.SMEM),   # scale (scalar)
            pl.BlockSpec(memory_space=pltpu.SMEM),   # bias  (scalar)
            tile_spec(),                             # value (int8)
            tile_spec(),                             # mask  (bool)
            tile_spec(),                             # origin (f32)
        ],
        out_specs=tile_spec(),
        compiler_params=pltpu.CompilerParams(
            dimension_semantics=("parallel",),
            vmem_limit_bytes=int(vmem_bytes),
        ),
    )(
        jnp.asarray([scale], jnp.float32),
        jnp.asarray([-float(zero_point) * float(scale)], jnp.float32),
        v2, m2, o2,
    )

    if padded_total != total:
        out = out.reshape(-1)[:total]
    return out.reshape(orig_shape)


if __name__ == "__main__":
    key = jax.random.PRNGKey(0)
    k_val, k_mask, k_origin = jax.random.split(key, 3)

    # Shapes consistent with a small conv weight (C_out, C_in, kH, kW)
    shape = (2, 4, 16, 16)          # 2048 elements

    # Deterministic "parameters"/buffers (synthetic — no checkpoint load)
    origin = jax.random.normal(k_origin, shape, dtype=jnp.float32)        # Parameter origin
    value = jax.random.randint(k_val, shape, -128, 128, dtype=jnp.int32).astype(jnp.int8)
    mask = jax.random.bernoulli(k_mask, p=0.5, shape=shape)               # bool buffer
    scale = 0.05
    zero_point = 3.0

    out = masked_leafq_forward(value, mask, origin, scale, zero_point)
    out = jax.block_until_ready(out)

    # Reference check (plain JAX, module semantics)
    ref = jnp.where(mask, (value.astype(jnp.float32) - zero_point) * scale, origin)
    assert out.shape == shape and out.dtype == jnp.float32
    assert jnp.allclose(out, ref, atol=1e-5, rtol=1e-5), "mismatch vs reference"

    print("KERNEL_OK")
</pallas_src>

<mosaic_0001>
module attributes {stable_mosaic.version = 11 : i64} {
  func.func @_masked_leafq_kernel(%arg0: i32, %arg1: memref<1xf32, #tpu.memory_space<smem>>, %arg2: memref<1xf32, #tpu.memory_space<smem>>, %arg3: memref<32x1024xi8, #tpu.memory_space<vmem>>, %arg4: memref<32x1024xi32, #tpu.memory_space<vmem>>, %arg5: memref<32x1024xf32, #tpu.memory_space<vmem>>, %arg6: memref<32x1024xf32, #tpu.memory_space<vmem>>) attributes {dimension_semantics = [#tpu.dimension_semantics<parallel>], iteration_bounds = array<i64: 1>, scalar_prefetch = 0 : i64, scratch_operands = 0 : i64, tpu.core_type = #tpu.core_type<tc>, window_params = [{transform_indices = @transform_0, window_bounds = array<i64: 1>}, {transform_indices = @transform_1, window_bounds = array<i64: 1>}, {transform_indices = @transform_2, window_bounds = array<i64: 32, 1024>}, {transform_indices = @transform_3, window_bounds = array<i64: 32, 1024>}, {transform_indices = @transform_4, window_bounds = array<i64: 32, 1024>}, {transform_indices = @transform_5, window_bounds = array<i64: 32, 1024>}]} {
    %c0 = arith.constant 0 : index
    %0 = memref.load %arg1[%c0] : memref<1xf32, #tpu.memory_space<smem>>
    %c0_0 = arith.constant 0 : index
    %1 = memref.load %arg2[%c0_0] : memref<1xf32, #tpu.memory_space<smem>>
    %c0_1 = arith.constant 0 : index
    %c0_2 = arith.constant 0 : index
    %2 = vector.load %arg3[%c0_1, %c0_2] : memref<32x1024xi8, #tpu.memory_space<vmem>>, vector<32x1024xi8>
    %3 = arith.sitofp %2 : vector<32x1024xi8> to vector<32x1024xf32>
    %4 = vector.broadcast %0 : f32 to vector<32x1024xf32>
    %5 = arith.mulf %3, %4 : vector<32x1024xf32>
    %6 = vector.broadcast %1 : f32 to vector<32x1024xf32>
    %7 = arith.addf %5, %6 : vector<32x1024xf32>
    %c0_3 = arith.constant 0 : index
    %c0_4 = arith.constant 0 : index
    %8 = vector.load %arg4[%c0_3, %c0_4] : memref<32x1024xi32, #tpu.memory_space<vmem>>, vector<32x1024xi32>
    %cst = arith.constant dense<0> : vector<32x1024xi32>
    %9 = arith.cmpi ne, %8, %cst : vector<32x1024xi32>
    %c0_5 = arith.constant 0 : index
    %c0_6 = arith.constant 0 : index
    %10 = vector.load %arg5[%c0_5, %c0_6] : memref<32x1024xf32, #tpu.memory_space<vmem>>, vector<32x1024xf32>
    %11 = arith.select %9, %7, %10 : vector<32x1024xi1>, vector<32x1024xf32>
    %c0_7 = arith.constant 0 : index
    %c0_8 = arith.constant 0 : index
    %12 = vector.load %arg6[%c0_7, %c0_8] : memref<32x1024xf32, #tpu.memory_space<vmem>>, vector<32x1024xf32>
    tpu.vector_store %arg6[%c0_7, %c0_8], %11 {strides = array<i32>} : memref<32x1024xf32, #tpu.memory_space<vmem>>, vector<32x1024xf32>,
    return
  }
  func.func @transform_0(%arg0: i32) -> i32 {
    %c0_i32 = arith.constant 0 : i32
    %c0_i32_0 = arith.constant 0 : i32
    return %c0_i32 : i32
  }
  func.func @transform_1(%arg0: i32) -> i32 {
    %c0_i32 = arith.constant 0 : i32
    %c0_i32_0 = arith.constant 0 : i32
    return %c0_i32 : i32
  }
  func.func @transform_2(%arg0: i32) -> (i32, i32) {
    %c0_i32 = arith.constant 0 : i32
    %c0_i32_0 = arith.constant 0 : i32
    return %arg0, %c0_i32 : i32, i32
  }
  func.func @transform_3(%arg0: i32) -> (i32, i32) {
    %c0_i32 = arith.constant 0 : i32
    %c0_i32_0 = arith.constant 0 : i32
    return %arg0, %c0_i32 : i32, i32
  }
  func.func @transform_4(%arg0: i32) -> (i32, i32) {
    %c0_i32 = arith.constant 0 : i32
    %c0_i32_0 = arith.constant 0 : i32
    return %arg0, %c0_i32 : i32, i32
  }
  func.func @transform_5(%arg0: i32) -> (i32, i32) {
    %c0_i32 = arith.constant 0 : i32
    %c0_i32_0 = arith.constant 0 : i32
    return %arg0, %c0_i32 : i32, i32
  }
}

</mosaic_0001>

<llo_original>
// kernel: tpu_custom_call.1
$region0: #{tpu_custom_call.1}
  #allocation0 [shape = 'u32[]', space=smem, size = 0x4, offset = 0x4, fixed_abs, tag = 'smem constant byte address 0x4 - core index']
  #allocation1 [shape = 'u32[144,128]{1,0:T(1,128)}', space=vmem, size = 0x12000, scoped, tag = 'internal scratch']
  #allocation2 [shape = 'f32[1]{0:T(128)S(6)}', space=smem, size = 0x200, scoped, tag = 'scoped memory for tpu_custom_call.1']
  #allocation3 [shape = 'f32[1]{0:T(128)S(6)}', space=smem, size = 0x200, scoped, tag = 'scoped memory for tpu_custom_call.1']
  %s0 = inlined_call_operand.<no memory space> [shape: f32[1], index: 0, kind: input, shape index: {}]
  %s1 = inlined_call_operand.<no memory space> [shape: f32[1], index: 1, kind: input, shape index: {}]
  %s2 = inlined_call_operand.vmem [shape: s8[32,1024], index: 2, kind: input, shape index: {}]
  %s3 = inlined_call_operand.vmem [shape: s32[32,1024], index: 3, kind: input, shape index: {}]
  %s4 = inlined_call_operand.vmem [shape: f32[32,1024], index: 4, kind: input, shape index: {}]
  %s5 = inlined_call_operand.hbm [shape: f32[32,1024], index: 5, kind: output, shape index: {}]
  %s6 = sld [smem:[#allocation0]]
  $region30: #{tpu_custom_call.1} parent=0
    _
  %s8 = ssub.s32 1, %s6
  %s9 = scalar_select 0, %s8, %s6
  %10 = sst [smem:[#allocation2]] %s0
  %11 = sst [smem:[#allocation3]] %s1
  $region1: #{tpu_custom_call.1} parent=0
    #allocation4 [shape = 'u8[131072]{0}', space=vmem, size = 0x20000, scoped, tag = 'output window, operand 0, single buffered']
    #allocation5 [shape = 's32[1]{0}', space=sflag, size = 0x4, scoped, tag = 'scoped memory for tpu_custom_call.1']
    %12 = vsyncpa [#allocation5], 0
    // Predicated region
    $region2: #{tpu_custom_call.1} parent=1 // pred_check
      _
    $region3: #{tpu_custom_call.1} parent=1 // pred_check_branch
      %14 = sbr.rel (0) target = $region5
    $region4: #{tpu_custom_call.1} parent=1 // pred_region
      _
    $region5: #{tpu_custom_call.1} parent=1 // pred_fallthru
      _
    // Predicated region
    $region6: #{tpu_custom_call.1} parent=1 // pred_check
      _
    $region7: #{tpu_custom_call.1} parent=1 // pred_check_branch
      %16 = sbr.rel (0) target = $region9
    $region8: #{tpu_custom_call.1} parent=1 // pred_region
      _
    $region9: #{tpu_custom_call.1} parent=1 // pred_fallthru
      _
    // Predicated region
    $region10: #{tpu_custom_call.1} parent=1 // pred_check
      _
    $region11: #{tpu_custom_call.1} parent=1 // pred_check_branch
      %18 = sbr.rel (0) target = $region13
    $region12: #{tpu_custom_call.1} parent=1 // pred_region
      _
    $region13: #{tpu_custom_call.1} parent=1 // pred_fallthru
      _
    // Predicated region
    $region14: #{tpu_custom_call.1} parent=1 // pred_check
      _
    $region15: #{tpu_custom_call.1} parent=1 // pred_check_branch
      %20 = sbr.rel (0) target = $region17
    $region16: #{tpu_custom_call.1} parent=1 // pred_region
      _
    $region17: #{tpu_custom_call.1} parent=1 // pred_fallthru
      _
    // Predicated region
    $region18: #{tpu_custom_call.1} parent=1 // pred_check
      _
    $region19: #{tpu_custom_call.1} parent=1 // pred_check_branch
      %22 = sbr.rel (0) target = $region21
    $region20: #{tpu_custom_call.1} parent=1 // pred_region
      _
    $region21: #{tpu_custom_call.1} parent=1 // pred_fallthru
      _
    %s23 = sld [smem:[#allocation2]]
    %s24 = sld [smem:[#allocation3]]
    %v25 = vld [vmem:[%s2] sm:$0xff]
    %v26 = vld [vmem:[%s2 + $0x8] sm:$0xff]
    %v27 = vld [vmem:[%s2 + $0x10] sm:$0xff]
    %v28 = vld [vmem:[%s2 + $0x18] sm:$0xff]
    %v29 = vld [vmem:[%s2 + $0x20] sm:$0xff]
    %v30 = vld [vmem:[%s2 + $0x28] sm:$0xff]
    %v31 = vld [vmem:[%s2 + $0x30] sm:$0xff]
    %v32 = vld [vmem:[%s2 + $0x38] sm:$0xff]
    %v33 = vunpack.c.0.s8 %v25
    %v34 = vunpack.c.0.s8 %v26
    %v35 = vunpack.c.0.s8 %v27
    %v36 = vunpack.c.0.s8 %v28
    %v37 = vunpack.c.0.s8 %v29
    %v38 = vunpack.c.0.s8 %v30
    %v39 = vunpack.c.0.s8 %v31
    %v40 = vunpack.c.0.s8 %v32
    %v41 = vunpack.c.1.s8 %v25
    %v42 = vunpack.c.1.s8 %v26
    %v43 = vunpack.c.1.s8 %v27
    %v44 = vunpack.c.1.s8 %v28
    %v45 = vunpack.c.1.s8 %v29
    %v46 = vunpack.c.1.s8 %v30
    %v47 = vunpack.c.1.s8 %v31
    %v48 = vunpack.c.1.s8 %v32
    %v49 = vunpack.c.2.s8 %v25
    %v50 = vunpack.c.2.s8 %v26
    %v51 = vunpack.c.2.s8 %v27
    %v52 = vunpack.c.2.s8 %v28
    %v53 = vunpack.c.2.s8 %v29
    %v54 = vunpack.c.2.s8 %v30
    %v55 = vunpack.c.2.s8 %v31
    %v56 = vunpack.c.2.s8 %v32
    %v57 = vunpack.c.3.s8 %v25
    %v58 = vunpack.c.3.s8 %v26
    %v59 = vunpack.c.3.s8 %v27
    %v60 = vunpack.c.3.s8 %v28
    %v61 = vunpack.c.3.s8 %v29
    %v62 = vunpack.c.3.s8 %v30
    %v63 = vunpack.c.3.s8 %v31
    %v64 = vunpack.c.3.s8 %v32
    %v65 = vcvt.s32.f32 %v33
    %v66 = vcvt.s32.f32 %v34
    %v67 = vcvt.s32.f32 %v35
    %v68 = vcvt.s32.f32 %v36
    %v69 = vcvt.s32.f32 %v37
    %v70 = vcvt.s32.f32 %v38
    %v71 = vcvt.s32.f32 %v39
    %v72 = vcvt.s32.f32 %v40
    %v73 = vcvt.s32.f32 %v41
    %v74 = vcvt.s32.f32 %v42
    %v75 = vcvt.s32.f32 %v43
    %v76 = vcvt.s32.f32 %v44
    %v77 = vcvt.s32.f32 %v45
    %v78 = vcvt.s32.f32 %v46
    %v79 = vcvt.s32.f32 %v47
    %v80 = vcvt.s32.f32 %v48
    %v81 = vcvt.s32.f32 %v49
    %v82 = vcvt.s32.f32 %v50
    %v83 = vcvt.s32.f32 %v51
    %v84 = vcvt.s32.f32 %v52
    %v85 = vcvt.s32.f32 %v53
    %v86 = vcvt.s32.f32 %v54
    %v87 = vcvt.s32.f32 %v55
    %v88 = vcvt.s32.f32 %v56
    %v89 = vcvt.s32.f32 %v57
    %v90 = vcvt.s32.f32 %v58
    %v91 = vcvt.s32.f32 %v59
    %v92 = vcvt.s32.f32 %v60
    %v93 = vcvt.s32.f32 %v61
    %v94 = vcvt.s32.f32 %v62
    %v95 = vcvt.s32.f32 %v63
    %v96 = vcvt.s32.f32 %v64
    %v97 = vstv %s23
    %v98 = vmul.f32 %v65, %v97
    %v99 = vmul.f32 %v66, %v97
    %v100 = vmul.f32 %v67, %v97
    %v101 = vmul.f32 %v68, %v97
    %v102 = vmul.f32 %v69, %v97
    %v103 = vmul.f32 %v70, %v97
    %v104 = vmul.f32 %v71, %v97
    %v105 = vmul.f32 %v72, %v97
    %v106 = vmul.f32 %v73, %v97
    %v107 = vmul.f32 %v74, %v97
    %v108 = vmul.f32 %v75, %v97
    %v109 = vmul.f32 %v76, %v97
    %v110 = vmul.f32 %v77, %v97
    %v111 = vmul.f32 %v78, %v97
    %v112 = vmul.f32 %v79, %v97
    %v113 = vmul.f32 %v80, %v97
    %v114 = vmul.f32 %v81, %v97
    %v115 = vmul.f32 %v82, %v97
    %v116 = vmul.f32 %v83, %v97
    %v117 = vmul.f32 %v84, %v97
    %v118 = vmul.f32 %v85, %v97
    %v119 = vmul.f32 %v86, %v97
    %v120 = vmul.f32 %v87, %v97
    %v121 = vmul.f32 %v88, %v97
    %v122 = vmul.f32 %v89, %v97
    %v123 = vmul.f32 %v90, %v97
    %v124 = vmul.f32 %v91, %v97
    %v125 = vmul.f32 %v92, %v97
    %v126 = vmul.f32 %v93, %v97
    %v127 = vmul.f32 %v94, %v97
    %v128 = vmul.f32 %v95, %v97
    %v129 = vmul.f32 %v96, %v97
    %v130 = vstv %s24
    %v131 = vadd.f32 %v98, %v130
    %v132 = vadd.f32 %v99, %v130
    %v133 = vadd.f32 %v100, %v130
    %v134 = vadd.f32 %v101, %v130
    %v135 = vadd.f32 %v102, %v130
    %v136 = vadd.f32 %v103, %v130
    %v137 = vadd.f32 %v104, %v130
    %v138 = vadd.f32 %v105, %v130
    %v139 = vadd.f32 %v106, %v130
    %v140 = vadd.f32 %v107, %v130
    %v141 = vadd.f32 %v108, %v130
    %v142 = vadd.f32 %v109, %v130
    %v143 = vadd.f32 %v110, %v130
    %v144 = vadd.f32 %v111, %v130
    %v145 = vadd.f32 %v112, %v130
    %v146 = vadd.f32 %v113, %v130
    %v147 = vadd.f32 %v114, %v130
    %v148 = vadd.f32 %v115, %v130
    %v149 = vadd.f32 %v116, %v130
    %v150 = vadd.f32 %v117, %v130
    %v151 = vadd.f32 %v118, %v130
    %v152 = vadd.f32 %v119, %v130
    %v153 = vadd.f32 %v120, %v130
    %v154 = vadd.f32 %v121, %v130
    %v155 = vadd.f32 %v122, %v130
    %v156 = vadd.f32 %v123, %v130
    %v157 = vadd.f32 %v124, %v130
    %v158 = vadd.f32 %v125, %v130
    %v159 = vadd.f32 %v126, %v130
    %v160 = vadd.f32 %v127, %v130
    %v161 = vadd.f32 %v128, %v130
    %v162 = vadd.f32 %v129, %v130
    %v163 = vld [vmem:[%s3] sm:$0xff]
    %v164 = vld [vmem:[%s3 + $0x8] sm:$0xff]
    %v165 = vld [vmem:[%s3 + $0x10] sm:$0xff]
    %v166 = vld [vmem:[%s3 + $0x18] sm:$0xff]
    %v167 = vld [vmem:[%s3 + $0x20] sm:$0xff]
    %v168 = vld [vmem:[%s3 + $0x28] sm:$0xff]
    %v169 = vld [vmem:[%s3 + $0x30] sm:$0xff]
    %v170 = vld [vmem:[%s3 + $0x38] sm:$0xff]
    %v171 = vld [vmem:[%s3 + $0x40] sm:$0xff]
    %v172 = vld [vmem:[%s3 + $0x48] sm:$0xff]
    %v173 = vld [vmem:[%s3 + $0x50] sm:$0xff]
    %v174 = vld [vmem:[%s3 + $0x58] sm:$0xff]
    %v175 = vld [vmem:[%s3 + $0x60] sm:$0xff]
    %v176 = vld [vmem:[%s3 + $0x68] sm:$0xff]
    %v177 = vld [vmem:[%s3 + $0x70] sm:$0xff]
    %v178 = vld [vmem:[%s3 + $0x78] sm:$0xff]
    %v179 = vld [vmem:[%s3 + $0x80] sm:$0xff]
    %v180 = vld [vmem:[%s3 + $0x88] sm:$0xff]
    %v181 = vld [vmem:[%s3 + $0x90] sm:$0xff]
    %v182 = vld [vmem:[%s3 + $0x98] sm:$0xff]
    %v183 = vld [vmem:[%s3 + $0xa0] sm:$0xff]
    %v184 = vld [vmem:[%s3 + $0xa8] sm:$0xff]
    %v185 = vld [vmem:[%s3 + $0xb0] sm:$0xff]
    %v186 = vld [vmem:[%s3 + $0xb8] sm:$0xff]
    %v187 = vld [vmem:[%s3 + $0xc0] sm:$0xff]
    %v188 = vld [vmem:[%s3 + $0xc8] sm:$0xff]
    %v189 = vld [vmem:[%s3 + $0xd0] sm:$0xff]
    %v190 = vld [vmem:[%s3 + $0xd8] sm:$0xff]
    %v191 = vld [vmem:[%s3 + $0xe0] sm:$0xff]
    %v192 = vld [vmem:[%s3 + $0xe8] sm:$0xff]
    %v193 = vld [vmem:[%s3 + $0xf0] sm:$0xff]
    %v194 = vld [vmem:[%s3 + $0xf8] sm:$0xff]
    %vm195 = vcmp.ne.s32.totalorder %v163, 0
    %vm196 = vcmp.ne.s32.totalorder %v164, 0
    %vm197 = vcmp.ne.s32.totalorder %v165, 0
    %vm198 = vcmp.ne.s32.totalorder %v166, 0
    %vm199 = vcmp.ne.s32.totalorder %v167, 0
    %vm200 = vcmp.ne.s32.totalorder %v168, 0
    %vm201 = vcmp.ne.s32.totalorder %v169, 0
    %vm202 = vcmp.ne.s32.totalorder %v170, 0
    %vm203 = vcmp.ne.s32.totalorder %v171, 0
    %vm204 = vcmp.ne.s32.totalorder %v172, 0
    %vm205 = vcmp.ne.s32.totalorder %v173, 0
    %vm206 = vcmp.ne.s32.totalorder %v174, 0
    %vm207 = vcmp.ne.s32.totalorder %v175, 0
    %vm208 = vcmp.ne.s32.totalorder %v176, 0
    %vm209 = vcmp.ne.s32.totalorder %v177, 0
    %vm210 = vcmp.ne.s32.totalorder %v178, 0
    %vm211 = vcmp.ne.s32.totalorder %v179, 0
    %vm212 = vcmp.ne.s32.totalorder %v180, 0
    %vm213 = vcmp.ne.s32.totalorder %v181, 0
    %vm214 = vcmp.ne.s32.totalorder %v182, 0
    %vm215 = vcmp.ne.s32.totalorder %v183, 0
    %vm216 = vcmp.ne.s32.totalorder %v184, 0
    %vm217 = vcmp.ne.s32.totalorder %v185, 0
    %vm218 = vcmp.ne.s32.totalorder %v186, 0
    %vm219 = vcmp.ne.s32.totalorder %v187, 0
    %vm220 = vcmp.ne.s32.totalorder %v188, 0
    %vm221 = vcmp.ne.s32.totalorder %v189, 0
    %vm222 = vcmp.ne.s32.totalorder %v190, 0
    %vm223 = vcmp.ne.s32.totalorder %v191, 0
    %vm224 = vcmp.ne.s32.totalorder %v192, 0
    %vm225 = vcmp.ne.s32.totalorder %v193, 0
    %vm226 = vcmp.ne.s32.totalorder %v194, 0
    %v227 = vld [vmem:[%s4] sm:$0xff]
    %v228 = vld [vmem:[%s4 + $0x8] sm:$0xff]
    %v229 = vld [vmem:[%s4 + $0x10] sm:$0xff]
    %v230 = vld [vmem:[%s4 + $0x18] sm:$0xff]
    %v231 = vld [vmem:[%s4 + $0x20] sm:$0xff]
    %v232 = vld [vmem:[%s4 + $0x28] sm:$0xff]
    %v233 = vld [vmem:[%s4 + $0x30] sm:$0xff]
    %v234 = vld [vmem:[%s4 + $0x38] sm:$0xff]
    %v235 = vld [vmem:[%s4 + $0x40] sm:$0xff]
    %v236 = vld [vmem:[%s4 + $0x48] sm:$0xff]
    %v237 = vld [vmem:[%s4 + $0x50] sm:$0xff]
    %v238 = vld [vmem:[%s4 + $0x58] sm:$0xff]
    %v239 = vld [vmem:[%s4 + $0x60] sm:$0xff]
    %v240 = vld [vmem:[%s4 + $0x68] sm:$0xff]
    %v241 = vld [vmem:[%s4 + $0x70] sm:$0xff]
    %v242 = vld [vmem:[%s4 + $0x78] sm:$0xff]
    %v243 = vld [vmem:[%s4 + $0x80] sm:$0xff]
    %v244 = vld [vmem:[%s4 + $0x88] sm:$0xff]
    %v245 = vld [vmem:[%s4 + $0x90] sm:$0xff]
    %v246 = vld [vmem:[%s4 + $0x98] sm:$0xff]
    %v247 = vld [vmem:[%s4 + $0xa0] sm:$0xff]
    %v248 = vld [vmem:[%s4 + $0xa8] sm:$0xff]
    %v249 = vld [vmem:[%s4 + $0xb0] sm:$0xff]
    %v250 = vld [vmem:[%s4 + $0xb8] sm:$0xff]
    %v251 = vld [vmem:[%s4 + $0xc0] sm:$0xff]
    %v252 = vld [vmem:[%s4 + $0xc8] sm:$0xff]
    %v253 = vld [vmem:[%s4 + $0xd0] sm:$0xff]
    %v254 = vld [vmem:[%s4 + $0xd8] sm:$0xff]
    %v255 = vld [vmem:[%s4 + $0xe0] sm:$0xff]
    %v256 = vld [vmem:[%s4 + $0xe8] sm:$0xff]
    %v257 = vld [vmem:[%s4 + $0xf0] sm:$0xff]
    %v258 = vld [vmem:[%s4 + $0xf8] sm:$0xff]
    %v259 = vsel %vm195, %v131, %v227
    %v260 = vsel %vm196, %v132, %v228
    %v261 = vsel %vm197, %v133, %v229
    %v262 = vsel %vm198, %v134, %v230
    %v263 = vsel %vm199, %v135, %v231
    %v264 = vsel %vm200, %v136, %v232
    %v265 = vsel %vm201, %v137, %v233
    %v266 = vsel %vm202, %v138, %v234
    %v267 = vsel %vm203, %v139, %v235
    %v268 = vsel %vm204, %v140, %v236
    %v269 = vsel %vm205, %v141, %v237
    %v270 = vsel %vm206, %v142, %v238
    %v271 = vsel %vm207, %v143, %v239
    %v272 = vsel %vm208, %v144, %v240
    %v273 = vsel %vm209, %v145, %v241
    %v274 = vsel %vm210, %v146, %v242
    %v275 = vsel %vm211, %v147, %v243
    %v276 = vsel %vm212, %v148, %v244
    %v277 = vsel %vm213, %v149, %v245
    %v278 = vsel %vm214, %v150, %v246
    %v279 = vsel %vm215, %v151, %v247
    %v280 = vsel %vm216, %v152, %v248
    %v281 = vsel %vm217, %v153, %v249
    %v282 = vsel %vm218, %v154, %v250
    %v283 = vsel %vm219, %v155, %v251
    %v284 = vsel %vm220, %v156, %v252
    %v285 = vsel %vm221, %v157, %v253
    %v286 = vsel %vm222, %v158, %v254
    %v287 = vsel %vm223, %v159, %v255
    %v288 = vsel %vm224, %v160, %v256
    %v289 = vsel %vm225, %v161, %v257
    %v290 = vsel %vm226, %v162, %v258
    %291 = vst [vmem:[#allocation4] sm:$0xff] %v259
    %292 = vst [vmem:[#allocation4 + $0x8] sm:$0xff] %v260
    %293 = vst [vmem:[#allocation4 + $0x10] sm:$0xff] %v261
    %294 = vst [vmem:[#allocation4 + $0x18] sm:$0xff] %v262
    %295 = vst [vmem:[#allocation4 + $0x20] sm:$0xff] %v263
    %296 = vst [vmem:[#allocation4 + $0x28] sm:$0xff] %v264
    %297 = vst [vmem:[#allocation4 + $0x30] sm:$0xff] %v265
    %298 = vst [vmem:[#allocation4 + $0x38] sm:$0xff] %v266
    %299 = vst [vmem:[#allocation4 + $0x40] sm:$0xff] %v267
    %300 = vst [vmem:[#allocation4 + $0x48] sm:$0xff] %v268
    %301 = vst [vmem:[#allocation4 + $0x50] sm:$0xff] %v269
    %302 = vst [vmem:[#allocation4 + $0x58] sm:$0xff] %v270
    %303 = vst [vmem:[#allocation4 + $0x60] sm:$0xff] %v271
    %304 = vst [vmem:[#allocation4 + $0x68] sm:$0xff] %v272
    %305 = vst [vmem:[#allocation4 + $0x70] sm:$0xff] %v273
    %306 = vst [vmem:[#allocation4 + $0x78] sm:$0xff] %v274
    %307 = vst [vmem:[#allocation4 + $0x80] sm:$0xff] %v275
    %308 = vst [vmem:[#allocation4 + $0x88] sm:$0xff] %v276
    %309 = vst [vmem:[#allocation4 + $0x90] sm:$0xff] %v277
    %310 = vst [vmem:[#allocation4 + $0x98] sm:$0xff] %v278
    %311 = vst [vmem:[#allocation4 + $0xa0] sm:$0xff] %v279
    %312 = vst [vmem:[#allocation4 + $0xa8] sm:$0xff] %v280
    %313 = vst [vmem:[#allocation4 + $0xb0] sm:$0xff] %v281
    %314 = vst [vmem:[#allocation4 + $0xb8] sm:$0xff] %v282
    %315 = vst [vmem:[#allocation4 + $0xc0] sm:$0xff] %v283
    %316 = vst [vmem:[#allocation4 + $0xc8] sm:$0xff] %v284
    %317 = vst [vmem:[#allocation4 + $0xd0] sm:$0xff] %v285
    %318 = vst [vmem:[#allocation4 + $0xd8] sm:$0xff] %v286
    %319 = vst [vmem:[#allocation4 + $0xe0] sm:$0xff] %v287
    %320 = vst [vmem:[#allocation4 + $0xe8] sm:$0xff] %v288
    %321 = vst [vmem:[#allocation4 + $0xf0] sm:$0xff] %v289
    %322 = vst [vmem:[#allocation4 + $0xf8] sm:$0xff] %v290
    // Predicated region
    $region22: #{tpu_custom_call.1} parent=1 // pred_check
      _
    $region23: #{tpu_custom_call.1} parent=1 // pred_check_branch
      %324 = sbr.rel (0) target = $region25
    $region24: #{tpu_custom_call.1} parent=1 // pred_region
      %s326 = ssub.s32 4096, 4096
      %327 = vsyncadd [#allocation5], %s326
      %s328 = sshll.u32 [#allocation4], 4
      %s329 = int_to_ptr.vmem [resolvable:$true] %s328
      %334 = dma.vmem_to_hbm [thread:$0]  %s329, 4096, %s5, [#allocation5], 1024, 1024, 64
    $region25: #{tpu_custom_call.1} parent=1 // pred_fallthru
      _
    // Predicated region
    $region26: #{tpu_custom_call.1} parent=1 // pred_check
      _
    $region27: #{tpu_custom_call.1} parent=1 // pred_check_branch
      %336 = sbr.rel (0) target = $region29
    $region28: #{tpu_custom_call.1} parent=1 // pred_region
      %337 = dma.done [#allocation5], 4096
    $region29: #{tpu_custom_call.1} parent=1 // pred_fallthru
      _
    %338 = vsyncpa [#allocation5], 1

</llo_original>
